<compile_context>
chip_gen: v7x
topology: tpu7x:2x2x1
jax: 0.10.0
libtpu: 0.0.40
codegen_flags: <defaults>
</compile_context>

<pallas_src>
import jax
import jax.numpy as jnp
from jax.experimental import pallas as pl
from jax.experimental.pallas import tpu as pltpu

IN_FEATURES = 10
OUT_FEATURES = 1
ROW_CHUNK = 512  # rows per inner strip: (512, 10) f32 ~= 64 vregs of liveness


def linear_kernel(b_ref, w_ref, x_ref, o_ref):
    # b_ref: SMEM f32[1]         -- bias scalar
    # w_ref: VMEM f32[1, 10]     -- weight row (constant block index -> resident)
    # x_ref: VMEM f32[tile, 10]  -- batch rows on sublanes, features on lanes
    # o_ref: VMEM f32[tile, 1]
    w = w_ref[...]                      # (1, 10), sublane-broadcast in the mul
    bias = b_ref[0]

    rows = o_ref.shape[0]               # static block size
    chunk = min(rows, ROW_CHUNK)
    n_full = rows // chunk

    def emit(r0, n):
        xc = x_ref[pl.ds(r0, n), :]                                  # (n, 10)
        yc = jnp.sum(xc * w, axis=-1, keepdims=True) + bias          # (n, 1)
        o_ref[pl.ds(r0, n), :] = yc.astype(o_ref.dtype)

    @pl.loop(0, n_full)
    def _(c):
        emit(pl.multiple_of(c * chunk, chunk), chunk)

    rem = rows - n_full * chunk          # static (trace-time) remainder
    if rem:
        emit(n_full * chunk, rem)


def _round_up(n, m):
    return ((n + m - 1) // m) * m


def simple_model_forward(x, w, b, *, tile_b=8192):
    """y = x @ w.T + b, matching torch nn.Linear(10, 1).

    x: (B, 10) f32, w: (1, 10) f32, b: (1,) f32  ->  (B, 1) f32
    """
    batch = x.shape[0]
    assert x.shape[1] == IN_FEATURES

    x = x.astype(jnp.float32)
    w_row = jnp.asarray(w, jnp.float32).reshape(1, IN_FEATURES)
    b_vec = jnp.asarray(b, jnp.float32).reshape(OUT_FEATURES)

    # Batch tile: a multiple of 8 sublanes, no larger than the rounded batch.
    tile = min(tile_b, _round_up(batch, 8))
    # v7x megacore: if the batch is big enough to split, guarantee >= 2 grid
    # blocks so the "parallel" axis shards across both TensorCores.
    if batch >= 16:
        tile = min(tile, _round_up(pl.cdiv(batch, 2), 8))
    tile = max(tile, 8)

    grid = (pl.cdiv(batch, tile),)       # ragged final block handled by Pallas

    out = pl.pallas_call(
        linear_kernel,
        out_shape=jax.ShapeDtypeStruct((batch, OUT_FEATURES), jnp.float32),
        grid=grid,
        in_specs=[
            pl.BlockSpec(memory_space=pltpu.MemorySpace.SMEM),        # bias
            pl.BlockSpec((1, IN_FEATURES), lambda i: (0, 0)),         # weights
            pl.BlockSpec((tile, IN_FEATURES), lambda i: (i, 0)),      # x rows
        ],
        out_specs=pl.BlockSpec((tile, OUT_FEATURES), lambda i: (i, 0)),
        compiler_params=pltpu.CompilerParams(
            dimension_semantics=("parallel",),
            vmem_limit_bytes=32 * 1024 * 1024,   # lifts v5e's 16 MiB default
        ),
    )(b_vec, w_row, x)

    return out


if __name__ == "__main__":
    key = jax.random.PRNGKey(0)
    kx, kw, kb, kx2 = jax.random.split(key, 4)

    # Deterministic parameter init (synthetic; not a checkpoint load).
    # Mimic PyTorch Linear's uniform(-1/sqrt(fan_in), 1/sqrt(fan_in)) range.
    bound = 1.0 / (IN_FEATURES ** 0.5)
    w = jax.random.uniform(kw, (OUT_FEATURES, IN_FEATURES),
                           minval=-bound, maxval=bound, dtype=jnp.float32)
    b = jax.random.uniform(kb, (OUT_FEATURES,),
                           minval=-bound, maxval=bound, dtype=jnp.float32)

    # Small shape consistent with the module: batch=8, features=10.
    batch = 8
    x = jax.random.normal(kx, (batch, IN_FEATURES), dtype=jnp.float32)

    y = simple_model_forward(x, w, b)
    y = jax.block_until_ready(y)

    y_ref = x @ w.T + b
    assert y.shape == (batch, OUT_FEATURES)
    assert jnp.allclose(y, y_ref, atol=1e-5, rtol=1e-5)

    # Second small check: ragged, multi-block grid (exercises the no-pad path).
    batch2 = 50
    x2 = jax.random.normal(kx2, (batch2, IN_FEATURES), dtype=jnp.float32)
    y2 = jax.block_until_ready(simple_model_forward(x2, w, b, tile_b=16))
    y2_ref = x2 @ w.T + b
    assert y2.shape == (batch2, OUT_FEATURES)
    assert jnp.allclose(y2, y2_ref, atol=1e-5, rtol=1e-5)

    print("KERNEL_OK")
</pallas_src>

<mosaic_0001>
module attributes {stable_mosaic.version = 11 : i64} {
  func.func @linear_kernel(%arg0: i32, %arg1: memref<1xf32, #tpu.memory_space<smem>>, %arg2: memref<1x10xf32, #tpu.memory_space<vmem>>, %arg3: memref<8x10xf32, #tpu.memory_space<vmem>>, %arg4: memref<8x1xf32, #tpu.memory_space<vmem>>) attributes {dimension_semantics = [#tpu.dimension_semantics<parallel>], iteration_bounds = array<i64: 1>, scalar_prefetch = 0 : i64, scratch_operands = 0 : i64, tpu.core_type = #tpu.core_type<tc>, window_params = [{transform_indices = @transform_0, window_bounds = array<i64: 1>}, {pipeline_mode = #tpu.pipeline_mode<synchronous>, transform_indices = @transform_1, window_bounds = array<i64: 1, 10>}, {transform_indices = @transform_2, window_bounds = array<i64: 8, 10>}, {transform_indices = @transform_3, window_bounds = array<i64: 8, 1>}]} {
    %c0 = arith.constant 0 : index
    %c0_0 = arith.constant 0 : index
    %0 = vector.load %arg2[%c0, %c0_0] : memref<1x10xf32, #tpu.memory_space<vmem>>, vector<1x10xf32>
    %c0_1 = arith.constant 0 : index
    %1 = memref.load %arg1[%c0_1] : memref<1xf32, #tpu.memory_space<smem>>
    %c0_i32 = arith.constant 0 : i32
    %c1_i32 = arith.constant 1 : i32
    %2 = arith.muli %c0_i32, %c1_i32 : i32
    %c0_i32_2 = arith.constant 0 : i32
    %3 = arith.addi %c0_i32_2, %2 : i32
    %c8_i32 = arith.constant 8 : i32
    %4 = arith.muli %3, %c8_i32 : i32
    %5 = tpu.assume_multiple %4, 8 : i32
    %6 = arith.index_cast %5 : i32 to index
    %c0_3 = arith.constant 0 : index
    %7 = vector.load %arg3[%6, %c0_3] : memref<8x10xf32, #tpu.memory_space<vmem>>, vector<8x10xf32>
    %8 = vector.broadcast %0 : vector<1x10xf32> to vector<8x10xf32>
    %9 = arith.mulf %7, %8 : vector<8x10xf32>
    %cst = arith.constant dense<0.000000e+00> : vector<8xf32>
    %10 = vector.multi_reduction <add>, %9, %cst [1] : vector<8x10xf32> to vector<8xf32>
    %11 = vector.shape_cast %10 : vector<8xf32> to vector<8x1xf32>
    %12 = vector.broadcast %1 : f32 to vector<8x1xf32>
    %13 = arith.addf %11, %12 : vector<8x1xf32>
    %14 = arith.index_cast %5 : i32 to index
    %c0_4 = arith.constant 0 : index
    %15 = vector.load %arg4[%14, %c0_4] : memref<8x1xf32, #tpu.memory_space<vmem>>, vector<8x1xf32>
    tpu.vector_store %arg4[%14, %c0_4], %13 {strides = array<i32>} : memref<8x1xf32, #tpu.memory_space<vmem>>, vector<8x1xf32>,
    %c1_i32_5 = arith.constant 1 : i32
    return
  }
  func.func @transform_0(%arg0: i32) -> i32 {
    %c0_i32 = arith.constant 0 : i32
    %c0_i32_0 = arith.constant 0 : i32
    return %c0_i32 : i32
  }
  func.func @transform_1(%arg0: i32) -> (i32, i32) {
    %c0_i32 = arith.constant 0 : i32
    %c0_i32_0 = arith.constant 0 : i32
    %c0_i32_1 = arith.constant 0 : i32
    return %c0_i32, %c0_i32_0 : i32, i32
  }
  func.func @transform_2(%arg0: i32) -> (i32, i32) {
    %c0_i32 = arith.constant 0 : i32
    %c0_i32_0 = arith.constant 0 : i32
    return %arg0, %c0_i32 : i32, i32
  }
  func.func @transform_3(%arg0: i32) -> (i32, i32) {
    %c0_i32 = arith.constant 0 : i32
    %c0_i32_0 = arith.constant 0 : i32
    return %arg0, %c0_i32 : i32, i32
  }
}

</mosaic_0001>

<llo_original>
// kernel: tpu_custom_call.1
$region0: #{tpu_custom_call.1}
  #allocation0 [shape = 'u32[]', space=smem, size = 0x4, offset = 0x4, fixed_abs, tag = 'smem constant byte address 0x4 - core index']
  #allocation1 [shape = 'u32[144,128]{1,0:T(1,128)}', space=vmem, size = 0x12000, scoped, tag = 'internal scratch']
  #allocation2 [shape = 'f32[1]{0:T(128)S(6)}', space=smem, size = 0x200, scoped, tag = 'scoped memory for tpu_custom_call.1']
  %s0 = inlined_call_operand.<no memory space> [shape: f32[1], index: 0, kind: input, shape index: {}]
  %s1 = inlined_call_operand.vmem [shape: f32[1,10], index: 1, kind: input, shape index: {}]
  %s2 = inlined_call_operand.hbm [shape: f32[8,10], index: 2, kind: input, shape index: {}]
  %s3 = inlined_call_operand.vmem [shape: f32[8,1], index: 3, kind: output, shape index: {}]
  %s4 = sld [smem:[#allocation0]]
  $region26: #{tpu_custom_call.1} parent=0
    _
  %s6 = ssub.s32 1, %s4
  %s7 = scalar_select 0, %s6, %s4
  %8 = sst [smem:[#allocation2]] %s0
  $region1: #{tpu_custom_call.1} parent=0
    #allocation3 [shape = 'u8[4096]{0}', space=vmem, size = 0x1000, scoped, tag = 'input window, operand 2, single buffered']
    #allocation4 [shape = 's32[1]{0}', space=sflag, size = 0x4, scoped, tag = 'scoped memory for tpu_custom_call.1']
    %9 = vsyncpa [#allocation4], 0
    // Predicated region
    $region2: #{tpu_custom_call.1} parent=1 // pred_check
      _
    $region3: #{tpu_custom_call.1} parent=1 // pred_check_branch
      %11 = sbr.rel (0) target = $region5
    $region4: #{tpu_custom_call.1} parent=1 // pred_region
      _
    $region5: #{tpu_custom_call.1} parent=1 // pred_fallthru
      _
    // Predicated region
    $region6: #{tpu_custom_call.1} parent=1 // pred_check
      _
    $region7: #{tpu_custom_call.1} parent=1 // pred_check_branch
      %13 = sbr.rel (0) target = $region9
    $region8: #{tpu_custom_call.1} parent=1 // pred_region
      _
    $region9: #{tpu_custom_call.1} parent=1 // pred_fallthru
      _
    // Predicated region
    $region10: #{tpu_custom_call.1} parent=1 // pred_check
      _
    $region11: #{tpu_custom_call.1} parent=1 // pred_check_branch
      %15 = sbr.rel (0) target = $region13
    $region12: #{tpu_custom_call.1} parent=1 // pred_region
      %s17 = ssub.s32 128, 128
      %18 = vsyncadd [#allocation4], %s17
      %s20 = sshll.u32 [#allocation3], 4
      %s21 = int_to_ptr.vmem [resolvable:$true] %s20
      %23 = dma.hbm_to_vmem [thread:$0]  %s2, 128, %s21, [#allocation4]
    $region13: #{tpu_custom_call.1} parent=1 // pred_fallthru
      _
    // Predicated region
    $region14: #{tpu_custom_call.1} parent=1 // pred_check
      _
    $region15: #{tpu_custom_call.1} parent=1 // pred_check_branch
      %25 = sbr.rel (0) target = $region17
    $region16: #{tpu_custom_call.1} parent=1 // pred_region
      %26 = dma.done [#allocation4], 128
    $region17: #{tpu_custom_call.1} parent=1 // pred_fallthru
      _
    %v27 = vld [vmem:[%s1] sm:$0x1]
    %s28 = sld [smem:[#allocation2]]
    %v29 = vld [vmem:[#allocation3] sm:$0xff]
    %v31 = vlaneseq
    %v32 = vshrl.u32 %v31, 7
    %v33 = vsub.s32 0, %v32
    %v34 = vrot.slane %v27, %v33
    %v36 = vmul.f32 %v29, %v34
    %vm37 = vcmask 80896
    %v38 = vsel %vm37, %v36, 0.0
    %39 = vadd.xlane.f32.xlu0 %v38
    %v40 = vpop.xlane.xlu0 %39
    %v41 = vstv %s28
    %v42 = vadd.f32 %v40, %v41
    %vm43 = vcmask 7168
    %44 = vst.msk [vmem:[%s3] sm:$0xff] %vm43, %v42
    // Predicated region
    $region18: #{tpu_custom_call.1} parent=1 // pred_check
      _
    $region19: #{tpu_custom_call.1} parent=1 // pred_check_branch
      %46 = sbr.rel (0) target = $region21
    $region20: #{tpu_custom_call.1} parent=1 // pred_region
      _
    $region21: #{tpu_custom_call.1} parent=1 // pred_fallthru
      _
    // Predicated region
    $region22: #{tpu_custom_call.1} parent=1 // pred_check
      _
    $region23: #{tpu_custom_call.1} parent=1 // pred_check_branch
      %48 = sbr.rel (0) target = $region25
    $region24: #{tpu_custom_call.1} parent=1 // pred_region
      _
    $region25: #{tpu_custom_call.1} parent=1 // pred_fallthru
      _
    %49 = vsyncpa [#allocation4], 1

</llo_original>
